<compile_context>
chip_gen: v7x
topology: tpu7x:2x2x1
jax: 0.10.0
libtpu: 0.0.40
codegen_flags: <defaults>
</compile_context>

<pallas_src>
import functools
import math

import jax
import jax.numpy as jnp
from jax.experimental import pallas as pl
from jax.experimental.pallas import tpu as pltpu


def _round_up(x, m):
    return ((x + m - 1) // m) * m


# ----------------------------- math helpers (kernel + reference) -----------------

def _erf(x, *, in_kernel=False):
    # exact-GELU needs erf; A&S 7.1.26 polynomial (|err| < 1.5e-7), built from
    # Mosaic-supported elementwise ops only.
    a1, a2, a3, a4, a5 = 0.254829592, -0.284496736, 1.421413741, -1.453152027, 1.061405429
    p = 0.3275911
    sgn = jnp.where(x >= 0.0, 1.0, -1.0)
    ax = jnp.abs(x)
    denom = 1.0 + p * ax
    # In-kernel: approx reciprocal moves the divide on the largest (B_blk, O)
    # tensor to the EUP slot (error ~2^-12, well inside the 2e-3 budget).
    t = pl.reciprocal(denom, approx=True) if in_kernel else 1.0 / denom
    poly = ((((a5 * t + a4) * t + a3) * t + a2) * t + a1) * t
    return sgn * (1.0 - poly * jnp.exp(-ax * ax))


def _gelu_exact(x, *, in_kernel=False):
    # nn.GELU() default (approximate='none') == 0.5*x*(1+erf(x/sqrt(2)))
    return 0.5 * x * (1.0 + _erf(x * (1.0 / math.sqrt(2.0)), in_kernel=in_kernel))


# ----------------------------------- Pallas kernel --------------------------------

def fuser_kernel(img_ref, txt_ref, w_emb_ref, w_sim_ref, gw_ref, bwb_ref, out_ref,
                 *, feat_dim, d):
    img = img_ref[...]                      # (Bb, D) f32
    txt = txt_ref[...]
    dif = jnp.abs(img - txt)
    mul = img * txt

    def rsum(a):                            # row sum -> (Bb, 1)
        return jnp.sum(a, axis=-1, keepdims=True)

    # squared norms (also reused for the cosine denominators)
    n_dif = rsum(dif * dif)
    n_mul = rsum(mul * mul)
    n_img = rsum(img * img)
    n_txt = rsum(txt * txt)

    def cos(num, na, nb):
        # clamp(na*nb, 1e-16) == clamp(denom, 1e-8)  (CosineSimilarity eps=1e-8);
        # single EUP rsqrt instead of sqrt + maximum + reciprocal.
        return num * jax.lax.rsqrt(jnp.maximum(na * nb, 1e-16))

    # the module's 6 pairs among [dif, mul, img, txt]: (1,0),(2,0),(2,1),(3,0),(3,1),(3,2)
    s10 = cos(rsum(mul * dif), n_mul, n_dif)
    s20 = cos(rsum(img * dif), n_img, n_dif)
    s21 = cos(rsum(img * mul), n_img, n_mul)
    s30 = cos(rsum(txt * dif), n_txt, n_dif)
    s31 = cos(rsum(txt * mul), n_txt, n_mul)
    s32 = cos(rsum(txt * img), n_txt, n_img)
    sims = (s10, s20, s21, s30, s31, s32)

    # LayerNorm stats over the *virtual* concatenation [dif|mul|img|txt|sims]
    inv_f = 1.0 / feat_dim
    tot = rsum(dif) + rsum(mul) + rsum(img) + rsum(txt) + sum(sims)
    mu = tot * inv_f
    # two-pass variance (explicit (x-mu)^2) — avoids E[x^2]-mu^2 cancellation;
    # negligible VALU cost next to the K=4D MXU matmul.
    var = (rsum(jnp.square(dif - mu)) + rsum(jnp.square(mul - mu))
           + rsum(jnp.square(img - mu)) + rsum(jnp.square(txt - mu)))
    for s in sims:
        var = var + jnp.square(s - mu)
    var = var * inv_f
    inv_std = jax.lax.rsqrt(var + 1e-5)               # nn.LayerNorm eps default

    # --- Linear with gamma folded into the weight rows (no materialised concat):
    #   LN(c) @ Wt + b = inv_std*[(c*gamma)@Wt] - inv_std*mu*(gamma@Wt) + (beta@Wt + b)
    # One fused K=4D matmul for the embedding segments (D=32 -> K=128 = full vreg row).
    emb = jnp.concatenate([dif, mul, img, txt], axis=-1)          # (Bb, 4D)
    acc = jnp.dot(emb, w_emb_ref[...], preferred_element_type=jnp.float32)

    # Similarity columns as one small (Bb, 8) @ (8, O) MXU matmul (off the VALU slot).
    bb = dif.shape[0]
    lane8 = jax.lax.broadcasted_iota(jnp.int32, (bb, 8), 1)
    sims_mat = jnp.zeros((bb, 8), jnp.float32)
    for k, s in enumerate(sims):                                   # static unroll
        sims_mat = sims_mat + jnp.where(lane8 == k, s, 0.0)
    acc = acc + jnp.dot(sims_mat, w_sim_ref[...], preferred_element_type=jnp.float32)

    z = inv_std * acc - (inv_std * mu) * gw_ref[...] + bwb_ref[...]
    out_ref[...] = _gelu_exact(z, in_kernel=True)


# ------------------------------------- wrapper -------------------------------------

def aligned_similarity_fuser(img, txt, params):
    """img, txt: (B, D) -> (B, O)."""
    B, D = img.shape
    F = 4 * D + 6
    gamma = params["ln_w"].astype(jnp.float32)
    beta = params["ln_b"].astype(jnp.float32)
    W = params["lin_w"].astype(jnp.float32)           # (O, F), PyTorch Linear layout
    b = params["lin_b"].astype(jnp.float32)           # (O,)
    O = W.shape[0]

    hp = functools.partial(jnp.dot, precision=jax.lax.Precision.HIGHEST)
    Wt = W.T                                          # (F, O)
    Wg = Wt * gamma[:, None]                          # gamma folded into weight rows
    w_emb = Wg[0:4 * D]                               # (4D, O): fused [dif|mul|img|txt] rows
    w_sim = jnp.pad(Wg[4 * D:F], ((0, 2), (0, 0)))    # (8, O): sublane-pad 6 -> 8
    gw = hp(gamma, Wt).reshape(1, O)                  # gamma @ Wt
    bwb = (hp(beta, Wt) + b).reshape(1, O)            # beta @ Wt + bias
    # TODO(synk): optional bf16 cast of w_emb / in-kernel LHS (v5e/v6e/v7x bf16 MXU)
    # once validated against the accuracy budget.

    # Batch blocking: large lane-dense blocks; for big batches guarantee >= 2 grid
    # steps so v7x can shard the "parallel" axis across its two TensorCores.
    if B <= 256:
        B_blk = max(8, _round_up(B, 8))               # single step for small batches
    else:
        B_blk = min(2048, _round_up(pl.cdiv(B, 2), 128))   # sweep knob: 512..4096
    B_pad = _round_up(B, B_blk)

    img_p = img.astype(jnp.float32)
    txt_p = txt.astype(jnp.float32)
    if B_pad != B:                                    # zero-pad rows (safe: cos()=0, no NaNs)
        img_p = jnp.pad(img_p, ((0, B_pad - B), (0, 0)))
        txt_p = jnp.pad(txt_p, ((0, B_pad - B), (0, 0)))

    out = pl.pallas_call(
        functools.partial(fuser_kernel, feat_dim=float(F), d=D),
        out_shape=jax.ShapeDtypeStruct((B_pad, O), jnp.float32),
        grid=(B_pad // B_blk,),
        in_specs=[pl.BlockSpec((B_blk, D), lambda i: (i, 0)),
                  pl.BlockSpec((B_blk, D), lambda i: (i, 0)),
                  pl.BlockSpec((4 * D, O), lambda i: (0, 0)),
                  pl.BlockSpec((8, O), lambda i: (0, 0)),
                  pl.BlockSpec((1, O), lambda i: (0, 0)),
                  pl.BlockSpec((1, O), lambda i: (0, 0))],
        out_specs=pl.BlockSpec((B_blk, O), lambda i: (i, 0)),
        # Per-step footprint (inputs+output double-buffered + weights) stays far
        # below the scoped-VMEM default (16 MiB v5e / 32 MiB v6e-v7x) at B_blk<=2048;
        # only set vmem_limit_bytes if B_blk is pushed past ~4096.
        compiler_params=pltpu.CompilerParams(dimension_semantics=("parallel",)),
    )(img_p, txt_p, w_emb, w_sim, gw, bwb)
    return out[:B]


# --------------------------------- pure-JAX reference -------------------------------

def reference_forward(img, txt, params):
    dif = jnp.abs(img - txt)
    mul = img * txt
    embs = [dif, mul, img, txt]

    def cs(a, b):  # CosineSimilarity(dim=-1, eps=1e-8)
        num = jnp.sum(a * b, axis=-1)
        den = jnp.maximum(jnp.sqrt(jnp.sum(a * a, -1) * jnp.sum(b * b, -1)), 1e-8)
        return num / den

    pairs = [(i, j) for i in range(4) for j in range(i) if i != j]
    sims = [cs(embs[i], embs[j])[..., None] for i, j in pairs]
    combined = jnp.concatenate(embs + sims, axis=-1)

    mu = jnp.mean(combined, axis=-1, keepdims=True)
    var = jnp.mean(jnp.square(combined - mu), axis=-1, keepdims=True)
    y = (combined - mu) * jax.lax.rsqrt(var + 1e-5) * params["ln_w"] + params["ln_b"]
    hp = functools.partial(jnp.dot, precision=jax.lax.Precision.HIGHEST)
    z = hp(y, params["lin_w"].T) + params["lin_b"]
    return _gelu_exact(z, in_kernel=False)


# ---------------------------------------- main ---------------------------------------

def init_params(key, D, O):
    F = 4 * D + 6
    ks = jax.random.split(key, 4)
    return dict(
        ln_w=1.0 + 0.1 * jax.random.normal(ks[0], (F,), jnp.float32),
        ln_b=0.1 * jax.random.normal(ks[1], (F,), jnp.float32),
        lin_w=0.08 * jax.random.normal(ks[2], (O, F), jnp.float32),
        lin_b=0.08 * jax.random.normal(ks[3], (O,), jnp.float32),
    )


if __name__ == "__main__":
    B, D, O = 8, 32, 128          # input_dim=32 -> combined feature dim 4*32+6 = 134
    key = jax.random.PRNGKey(0)
    k_img, k_txt, k_par = jax.random.split(key, 3)
    img = jax.random.normal(k_img, (B, D), jnp.float32)
    txt = jax.random.normal(k_txt, (B, D), jnp.float32)
    params = init_params(k_par, D, O)

    out = aligned_similarity_fuser(img, txt, params)
    out = jax.block_until_ready(out)
    assert out.shape == (B, O)

    ref = reference_forward(img, txt, params)
    max_err = float(jnp.max(jnp.abs(out - ref)))
    if max_err < 2e-3:
        print("KERNEL_OK")
    else:
        print(f"MISMATCH max_err={max_err}")
</pallas_src>

<mosaic_0001>
module attributes {stable_mosaic.version = 11 : i64} {
  func.func @fuser_kernel(%arg0: i32, %arg1: memref<8x32xf32, #tpu.memory_space<vmem>>, %arg2: memref<8x32xf32, #tpu.memory_space<vmem>>, %arg3: memref<128x128xf32, #tpu.memory_space<vmem>>, %arg4: memref<8x128xf32, #tpu.memory_space<vmem>>, %arg5: memref<1x128xf32, #tpu.memory_space<vmem>>, %arg6: memref<1x128xf32, #tpu.memory_space<vmem>>, %arg7: memref<8x128xf32, #tpu.memory_space<vmem>>) attributes {dimension_semantics = [#tpu.dimension_semantics<parallel>], iteration_bounds = array<i64: 1>, scalar_prefetch = 0 : i64, scratch_operands = 0 : i64, tpu.core_type = #tpu.core_type<tc>, window_params = [{transform_indices = @transform_0, window_bounds = array<i64: 8, 32>}, {transform_indices = @transform_1, window_bounds = array<i64: 8, 32>}, {pipeline_mode = #tpu.pipeline_mode<synchronous>, transform_indices = @transform_2, window_bounds = array<i64: 128, 128>}, {pipeline_mode = #tpu.pipeline_mode<synchronous>, transform_indices = @transform_3, window_bounds = array<i64: 8, 128>}, {pipeline_mode = #tpu.pipeline_mode<synchronous>, transform_indices = @transform_4, window_bounds = array<i64: 1, 128>}, {pipeline_mode = #tpu.pipeline_mode<synchronous>, transform_indices = @transform_5, window_bounds = array<i64: 1, 128>}, {transform_indices = @transform_6, window_bounds = array<i64: 8, 128>}]} {
    %c0 = arith.constant 0 : index
    %c0_0 = arith.constant 0 : index
    %0 = vector.load %arg1[%c0, %c0_0] : memref<8x32xf32, #tpu.memory_space<vmem>>, vector<8x32xf32>
    %c0_1 = arith.constant 0 : index
    %c0_2 = arith.constant 0 : index
    %1 = vector.load %arg2[%c0_1, %c0_2] : memref<8x32xf32, #tpu.memory_space<vmem>>, vector<8x32xf32>
    %2 = arith.subf %0, %1 : vector<8x32xf32>
    %3 = math.absf %2 : vector<8x32xf32>
    %4 = arith.mulf %0, %1 : vector<8x32xf32>
    %5 = arith.mulf %3, %3 : vector<8x32xf32>
    %cst = arith.constant dense<0.000000e+00> : vector<8xf32>
    %6 = vector.multi_reduction <add>, %5, %cst [1] : vector<8x32xf32> to vector<8xf32>
    %7 = vector.shape_cast %6 : vector<8xf32> to vector<8x1xf32>
    %8 = arith.mulf %4, %4 : vector<8x32xf32>
    %cst_3 = arith.constant dense<0.000000e+00> : vector<8xf32>
    %9 = vector.multi_reduction <add>, %8, %cst_3 [1] : vector<8x32xf32> to vector<8xf32>
    %10 = vector.shape_cast %9 : vector<8xf32> to vector<8x1xf32>
    %11 = arith.mulf %0, %0 : vector<8x32xf32>
    %cst_4 = arith.constant dense<0.000000e+00> : vector<8xf32>
    %12 = vector.multi_reduction <add>, %11, %cst_4 [1] : vector<8x32xf32> to vector<8xf32>
    %13 = vector.shape_cast %12 : vector<8xf32> to vector<8x1xf32>
    %14 = arith.mulf %1, %1 : vector<8x32xf32>
    %cst_5 = arith.constant dense<0.000000e+00> : vector<8xf32>
    %15 = vector.multi_reduction <add>, %14, %cst_5 [1] : vector<8x32xf32> to vector<8xf32>
    %16 = vector.shape_cast %15 : vector<8xf32> to vector<8x1xf32>
    %17 = arith.mulf %4, %3 : vector<8x32xf32>
    %cst_6 = arith.constant dense<0.000000e+00> : vector<8xf32>
    %18 = vector.multi_reduction <add>, %17, %cst_6 [1] : vector<8x32xf32> to vector<8xf32>
    %19 = vector.shape_cast %18 : vector<8xf32> to vector<8x1xf32>
    %20 = arith.mulf %10, %7 : vector<8x1xf32>
    %cst_7 = arith.constant 1.000000e-16 : f32
    %21 = vector.broadcast %cst_7 : f32 to vector<8x1xf32>
    %22 = arith.maximumf %20, %21 : vector<8x1xf32>
    %23 = math.rsqrt %22 : vector<8x1xf32>
    %24 = arith.mulf %19, %23 : vector<8x1xf32>
    %25 = arith.mulf %0, %3 : vector<8x32xf32>
    %cst_8 = arith.constant dense<0.000000e+00> : vector<8xf32>
    %26 = vector.multi_reduction <add>, %25, %cst_8 [1] : vector<8x32xf32> to vector<8xf32>
    %27 = vector.shape_cast %26 : vector<8xf32> to vector<8x1xf32>
    %28 = arith.mulf %13, %7 : vector<8x1xf32>
    %cst_9 = arith.constant 1.000000e-16 : f32
    %29 = vector.broadcast %cst_9 : f32 to vector<8x1xf32>
    %30 = arith.maximumf %28, %29 : vector<8x1xf32>
    %31 = math.rsqrt %30 : vector<8x1xf32>
    %32 = arith.mulf %27, %31 : vector<8x1xf32>
    %33 = arith.mulf %0, %4 : vector<8x32xf32>
    %cst_10 = arith.constant dense<0.000000e+00> : vector<8xf32>
    %34 = vector.multi_reduction <add>, %33, %cst_10 [1] : vector<8x32xf32> to vector<8xf32>
    %35 = vector.shape_cast %34 : vector<8xf32> to vector<8x1xf32>
    %36 = arith.mulf %13, %10 : vector<8x1xf32>
    %cst_11 = arith.constant 1.000000e-16 : f32
    %37 = vector.broadcast %cst_11 : f32 to vector<8x1xf32>
    %38 = arith.maximumf %36, %37 : vector<8x1xf32>
    %39 = math.rsqrt %38 : vector<8x1xf32>
    %40 = arith.mulf %35, %39 : vector<8x1xf32>
    %41 = arith.mulf %1, %3 : vector<8x32xf32>
    %cst_12 = arith.constant dense<0.000000e+00> : vector<8xf32>
    %42 = vector.multi_reduction <add>, %41, %cst_12 [1] : vector<8x32xf32> to vector<8xf32>
    %43 = vector.shape_cast %42 : vector<8xf32> to vector<8x1xf32>
    %44 = arith.mulf %16, %7 : vector<8x1xf32>
    %cst_13 = arith.constant 1.000000e-16 : f32
    %45 = vector.broadcast %cst_13 : f32 to vector<8x1xf32>
    %46 = arith.maximumf %44, %45 : vector<8x1xf32>
    %47 = math.rsqrt %46 : vector<8x1xf32>
    %48 = arith.mulf %43, %47 : vector<8x1xf32>
    %49 = arith.mulf %1, %4 : vector<8x32xf32>
    %cst_14 = arith.constant dense<0.000000e+00> : vector<8xf32>
    %50 = vector.multi_reduction <add>, %49, %cst_14 [1] : vector<8x32xf32> to vector<8xf32>
    %51 = vector.shape_cast %50 : vector<8xf32> to vector<8x1xf32>
    %52 = arith.mulf %16, %10 : vector<8x1xf32>
    %cst_15 = arith.constant 1.000000e-16 : f32
    %53 = vector.broadcast %cst_15 : f32 to vector<8x1xf32>
    %54 = arith.maximumf %52, %53 : vector<8x1xf32>
    %55 = math.rsqrt %54 : vector<8x1xf32>
    %56 = arith.mulf %51, %55 : vector<8x1xf32>
    %57 = arith.mulf %1, %0 : vector<8x32xf32>
    %cst_16 = arith.constant dense<0.000000e+00> : vector<8xf32>
    %58 = vector.multi_reduction <add>, %57, %cst_16 [1] : vector<8x32xf32> to vector<8xf32>
    %59 = vector.shape_cast %58 : vector<8xf32> to vector<8x1xf32>
    %60 = arith.mulf %16, %13 : vector<8x1xf32>
    %cst_17 = arith.constant 1.000000e-16 : f32
    %61 = vector.broadcast %cst_17 : f32 to vector<8x1xf32>
    %62 = arith.maximumf %60, %61 : vector<8x1xf32>
    %63 = math.rsqrt %62 : vector<8x1xf32>
    %64 = arith.mulf %59, %63 : vector<8x1xf32>
    %cst_18 = arith.constant dense<0.000000e+00> : vector<8xf32>
    %65 = vector.multi_reduction <add>, %3, %cst_18 [1] : vector<8x32xf32> to vector<8xf32>
    %66 = vector.shape_cast %65 : vector<8xf32> to vector<8x1xf32>
    %cst_19 = arith.constant dense<0.000000e+00> : vector<8xf32>
    %67 = vector.multi_reduction <add>, %4, %cst_19 [1] : vector<8x32xf32> to vector<8xf32>
    %68 = vector.shape_cast %67 : vector<8xf32> to vector<8x1xf32>
    %69 = arith.addf %66, %68 : vector<8x1xf32>
    %cst_20 = arith.constant dense<0.000000e+00> : vector<8xf32>
    %70 = vector.multi_reduction <add>, %0, %cst_20 [1] : vector<8x32xf32> to vector<8xf32>
    %71 = vector.shape_cast %70 : vector<8xf32> to vector<8x1xf32>
    %72 = arith.addf %69, %71 : vector<8x1xf32>
    %cst_21 = arith.constant dense<0.000000e+00> : vector<8xf32>
    %73 = vector.multi_reduction <add>, %1, %cst_21 [1] : vector<8x32xf32> to vector<8xf32>
    %74 = vector.shape_cast %73 : vector<8xf32> to vector<8x1xf32>
    %75 = arith.addf %72, %74 : vector<8x1xf32>
    %cst_22 = arith.constant 0.000000e+00 : f32
    %76 = vector.broadcast %cst_22 : f32 to vector<8x1xf32>
    %77 = arith.addf %76, %24 : vector<8x1xf32>
    %78 = arith.addf %77, %32 : vector<8x1xf32>
    %79 = arith.addf %78, %40 : vector<8x1xf32>
    %80 = arith.addf %79, %48 : vector<8x1xf32>
    %81 = arith.addf %80, %56 : vector<8x1xf32>
    %82 = arith.addf %81, %64 : vector<8x1xf32>
    %83 = arith.addf %75, %82 : vector<8x1xf32>
    %cst_23 = arith.constant 0.00746268639 : f32
    %84 = vector.broadcast %cst_23 : f32 to vector<8x1xf32>
    %85 = arith.mulf %83, %84 : vector<8x1xf32>
    %86 = vector.broadcast %85 : vector<8x1xf32> to vector<8x32xf32>
    %87 = arith.subf %3, %86 : vector<8x32xf32>
    %88 = arith.mulf %87, %87 : vector<8x32xf32>
    %cst_24 = arith.constant dense<0.000000e+00> : vector<8xf32>
    %89 = vector.multi_reduction <add>, %88, %cst_24 [1] : vector<8x32xf32> to vector<8xf32>
    %90 = vector.shape_cast %89 : vector<8xf32> to vector<8x1xf32>
    %91 = vector.broadcast %85 : vector<8x1xf32> to vector<8x32xf32>
    %92 = arith.subf %4, %91 : vector<8x32xf32>
    %93 = arith.mulf %92, %92 : vector<8x32xf32>
    %cst_25 = arith.constant dense<0.000000e+00> : vector<8xf32>
    %94 = vector.multi_reduction <add>, %93, %cst_25 [1] : vector<8x32xf32> to vector<8xf32>
    %95 = vector.shape_cast %94 : vector<8xf32> to vector<8x1xf32>
    %96 = arith.addf %90, %95 : vector<8x1xf32>
    %97 = vector.broadcast %85 : vector<8x1xf32> to vector<8x32xf32>
    %98 = arith.subf %0, %97 : vector<8x32xf32>
    %99 = arith.mulf %98, %98 : vector<8x32xf32>
    %cst_26 = arith.constant dense<0.000000e+00> : vector<8xf32>
    %100 = vector.multi_reduction <add>, %99, %cst_26 [1] : vector<8x32xf32> to vector<8xf32>
    %101 = vector.shape_cast %100 : vector<8xf32> to vector<8x1xf32>
    %102 = arith.addf %96, %101 : vector<8x1xf32>
    %103 = vector.broadcast %85 : vector<8x1xf32> to vector<8x32xf32>
    %104 = arith.subf %1, %103 : vector<8x32xf32>
    %105 = arith.mulf %104, %104 : vector<8x32xf32>
    %cst_27 = arith.constant dense<0.000000e+00> : vector<8xf32>
    %106 = vector.multi_reduction <add>, %105, %cst_27 [1] : vector<8x32xf32> to vector<8xf32>
    %107 = vector.shape_cast %106 : vector<8xf32> to vector<8x1xf32>
    %108 = arith.addf %102, %107 : vector<8x1xf32>
    %109 = arith.subf %24, %85 : vector<8x1xf32>
    %110 = arith.mulf %109, %109 : vector<8x1xf32>
    %111 = arith.addf %108, %110 : vector<8x1xf32>
    %112 = arith.subf %32, %85 : vector<8x1xf32>
    %113 = arith.mulf %112, %112 : vector<8x1xf32>
    %114 = arith.addf %111, %113 : vector<8x1xf32>
    %115 = arith.subf %40, %85 : vector<8x1xf32>
    %116 = arith.mulf %115, %115 : vector<8x1xf32>
    %117 = arith.addf %114, %116 : vector<8x1xf32>
    %118 = arith.subf %48, %85 : vector<8x1xf32>
    %119 = arith.mulf %118, %118 : vector<8x1xf32>
    %120 = arith.addf %117, %119 : vector<8x1xf32>
    %121 = arith.subf %56, %85 : vector<8x1xf32>
    %122 = arith.mulf %121, %121 : vector<8x1xf32>
    %123 = arith.addf %120, %122 : vector<8x1xf32>
    %124 = arith.subf %64, %85 : vector<8x1xf32>
    %125 = arith.mulf %124, %124 : vector<8x1xf32>
    %126 = arith.addf %123, %125 : vector<8x1xf32>
    %cst_28 = arith.constant 0.00746268639 : f32
    %127 = vector.broadcast %cst_28 : f32 to vector<8x1xf32>
    %128 = arith.mulf %126, %127 : vector<8x1xf32>
    %cst_29 = arith.constant 9.99999974E-6 : f32
    %129 = vector.broadcast %cst_29 : f32 to vector<8x1xf32>
    %130 = arith.addf %128, %129 : vector<8x1xf32>
    %131 = math.rsqrt %130 : vector<8x1xf32>
    %132 = tpu.concatenate %3, %4, %0, %1 in 1 : vector<8x32xf32>, vector<8x32xf32>, vector<8x32xf32>, vector<8x32xf32> -> vector<8x128xf32>
    %c0_30 = arith.constant 0 : index
    %c0_31 = arith.constant 0 : index
    %133 = vector.load %arg3[%c0_30, %c0_31] : memref<128x128xf32, #tpu.memory_space<vmem>>, vector<128x128xf32>
    %cst_32 = arith.constant dense<0.000000e+00> : vector<8x128xf32>
    %134 = tpu.matmul %132, %133, %cst_32 {dimension_numbers = #tpu.dot_dimension_numbers<[1], [0], [0], [1], [0, 0, 1, 1], [], []>} : vector<8x128xf32>, vector<128x128xf32>, vector<8x128xf32> -> vector<8x128xf32>
    %135 = tpu.iota {dimensions = array<i32: 1>} : vector<8x8xi32>
    %cst_33 = arith.constant 0.000000e+00 : f32
    %136 = vector.broadcast %cst_33 : f32 to vector<8x8xf32>
    %c0_i32 = arith.constant 0 : i32
    %137 = vector.broadcast %c0_i32 : i32 to vector<8x8xi32>
    %138 = arith.cmpi eq, %135, %137 : vector<8x8xi32>
    %cst_34 = arith.constant 0.000000e+00 : f32
    %139 = vector.shape_cast %24 : vector<8x1xf32> to vector<8x1xf32>
    %140 = vector.broadcast %139 : vector<8x1xf32> to vector<8x8xf32>
    %141 = vector.broadcast %cst_34 : f32 to vector<8x8xf32>
    %142 = arith.select %138, %140, %141 : vector<8x8xi1>, vector<8x8xf32>
    %143 = arith.addf %136, %142 : vector<8x8xf32>
    %c1_i32 = arith.constant 1 : i32
    %144 = vector.broadcast %c1_i32 : i32 to vector<8x8xi32>
    %145 = arith.cmpi eq, %135, %144 : vector<8x8xi32>
    %cst_35 = arith.constant 0.000000e+00 : f32
    %146 = vector.shape_cast %32 : vector<8x1xf32> to vector<8x1xf32>
    %147 = vector.broadcast %146 : vector<8x1xf32> to vector<8x8xf32>
    %148 = vector.broadcast %cst_35 : f32 to vector<8x8xf32>
    %149 = arith.select %145, %147, %148 : vector<8x8xi1>, vector<8x8xf32>
    %150 = arith.addf %143, %149 : vector<8x8xf32>
    %c2_i32 = arith.constant 2 : i32
    %151 = vector.broadcast %c2_i32 : i32 to vector<8x8xi32>
    %152 = arith.cmpi eq, %135, %151 : vector<8x8xi32>
    %cst_36 = arith.constant 0.000000e+00 : f32
    %153 = vector.shape_cast %40 : vector<8x1xf32> to vector<8x1xf32>
    %154 = vector.broadcast %153 : vector<8x1xf32> to vector<8x8xf32>
    %155 = vector.broadcast %cst_36 : f32 to vector<8x8xf32>
    %156 = arith.select %152, %154, %155 : vector<8x8xi1>, vector<8x8xf32>
    %157 = arith.addf %150, %156 : vector<8x8xf32>
    %c3_i32 = arith.constant 3 : i32
    %158 = vector.broadcast %c3_i32 : i32 to vector<8x8xi32>
    %159 = arith.cmpi eq, %135, %158 : vector<8x8xi32>
    %cst_37 = arith.constant 0.000000e+00 : f32
    %160 = vector.shape_cast %48 : vector<8x1xf32> to vector<8x1xf32>
    %161 = vector.broadcast %160 : vector<8x1xf32> to vector<8x8xf32>
    %162 = vector.broadcast %cst_37 : f32 to vector<8x8xf32>
    %163 = arith.select %159, %161, %162 : vector<8x8xi1>, vector<8x8xf32>
    %164 = arith.addf %157, %163 : vector<8x8xf32>
    %c4_i32 = arith.constant 4 : i32
    %165 = vector.broadcast %c4_i32 : i32 to vector<8x8xi32>
    %166 = arith.cmpi eq, %135, %165 : vector<8x8xi32>
    %cst_38 = arith.constant 0.000000e+00 : f32
    %167 = vector.shape_cast %56 : vector<8x1xf32> to vector<8x1xf32>
    %168 = vector.broadcast %167 : vector<8x1xf32> to vector<8x8xf32>
    %169 = vector.broadcast %cst_38 : f32 to vector<8x8xf32>
    %170 = arith.select %166, %168, %169 : vector<8x8xi1>, vector<8x8xf32>
    %171 = arith.addf %164, %170 : vector<8x8xf32>
    %c5_i32 = arith.constant 5 : i32
    %172 = vector.broadcast %c5_i32 : i32 to vector<8x8xi32>
    %173 = arith.cmpi eq, %135, %172 : vector<8x8xi32>
    %cst_39 = arith.constant 0.000000e+00 : f32
    %174 = vector.shape_cast %64 : vector<8x1xf32> to vector<8x1xf32>
    %175 = vector.broadcast %174 : vector<8x1xf32> to vector<8x8xf32>
    %176 = vector.broadcast %cst_39 : f32 to vector<8x8xf32>
    %177 = arith.select %173, %175, %176 : vector<8x8xi1>, vector<8x8xf32>
    %178 = arith.addf %171, %177 : vector<8x8xf32>
    %c0_40 = arith.constant 0 : index
    %c0_41 = arith.constant 0 : index
    %179 = vector.load %arg4[%c0_40, %c0_41] : memref<8x128xf32, #tpu.memory_space<vmem>>, vector<8x128xf32>
    %cst_42 = arith.constant dense<0.000000e+00> : vector<8x128xf32>
    %180 = tpu.matmul %178, %179, %cst_42 {dimension_numbers = #tpu.dot_dimension_numbers<[1], [0], [0], [1], [0, 0, 1, 1], [], []>} : vector<8x8xf32>, vector<8x128xf32>, vector<8x128xf32> -> vector<8x128xf32>
    %181 = arith.addf %134, %180 : vector<8x128xf32>
    %182 = vector.broadcast %131 : vector<8x1xf32> to vector<8x128xf32>
    %183 = arith.mulf %182, %181 : vector<8x128xf32>
    %184 = arith.mulf %131, %85 : vector<8x1xf32>
    %c0_43 = arith.constant 0 : index
    %c0_44 = arith.constant 0 : index
    %185 = vector.load %arg5[%c0_43, %c0_44] : memref<1x128xf32, #tpu.memory_space<vmem>>, vector<1x128xf32>
    %186 = vector.broadcast %184 : vector<8x1xf32> to vector<8x128xf32>
    %187 = vector.broadcast %185 : vector<1x128xf32> to vector<8x128xf32>
    %188 = arith.mulf %186, %187 : vector<8x128xf32>
    %189 = arith.subf %183, %188 : vector<8x128xf32>
    %c0_45 = arith.constant 0 : index
    %c0_46 = arith.constant 0 : index
    %190 = vector.load %arg6[%c0_45, %c0_46] : memref<1x128xf32, #tpu.memory_space<vmem>>, vector<1x128xf32>
    %191 = vector.broadcast %190 : vector<1x128xf32> to vector<8x128xf32>
    %192 = arith.addf %189, %191 : vector<8x128xf32>
    %cst_47 = arith.constant 5.000000e-01 : f32
    %193 = vector.broadcast %cst_47 : f32 to vector<8x128xf32>
    %194 = arith.mulf %193, %192 : vector<8x128xf32>
    %cst_48 = arith.constant 0.707106769 : f32
    %195 = vector.broadcast %cst_48 : f32 to vector<8x128xf32>
    %196 = arith.mulf %192, %195 : vector<8x128xf32>
    %cst_49 = arith.constant 0.000000e+00 : f32
    %197 = vector.broadcast %cst_49 : f32 to vector<8x128xf32>
    %198 = arith.cmpf oge, %196, %197 : vector<8x128xf32>
    %cst_50 = arith.constant 1.000000e+00 : f32
    %cst_51 = arith.constant -1.000000e+00 : f32
    %199 = vector.broadcast %cst_50 : f32 to vector<8x128xf32>
    %200 = vector.broadcast %cst_51 : f32 to vector<8x128xf32>
    %201 = arith.select %198, %199, %200 : vector<8x128xi1>, vector<8x128xf32>
    %202 = math.absf %196 : vector<8x128xf32>
    %cst_52 = arith.constant 0.327591091 : f32
    %203 = vector.broadcast %cst_52 : f32 to vector<8x128xf32>
    %204 = arith.mulf %203, %202 : vector<8x128xf32>
    %cst_53 = arith.constant 1.000000e+00 : f32
    %205 = vector.broadcast %cst_53 : f32 to vector<8x128xf32>
    %206 = arith.addf %205, %204 : vector<8x128xf32>
    %207 = tpu.reciprocal %206 {approx = true} : vector<8x128xf32> -> vector<8x128xf32>
    %cst_54 = arith.constant 1.06140542 : f32
    %208 = vector.broadcast %cst_54 : f32 to vector<8x128xf32>
    %209 = arith.mulf %208, %207 : vector<8x128xf32>
    %cst_55 = arith.constant -1.45315206 : f32
    %210 = vector.broadcast %cst_55 : f32 to vector<8x128xf32>
    %211 = arith.addf %209, %210 : vector<8x128xf32>
    %212 = arith.mulf %211, %207 : vector<8x128xf32>
    %cst_56 = arith.constant 1.42141378 : f32
    %213 = vector.broadcast %cst_56 : f32 to vector<8x128xf32>
    %214 = arith.addf %212, %213 : vector<8x128xf32>
    %215 = arith.mulf %214, %207 : vector<8x128xf32>
    %cst_57 = arith.constant -0.284496725 : f32
    %216 = vector.broadcast %cst_57 : f32 to vector<8x128xf32>
    %217 = arith.addf %215, %216 : vector<8x128xf32>
    %218 = arith.mulf %217, %207 : vector<8x128xf32>
    %cst_58 = arith.constant 0.254829586 : f32
    %219 = vector.broadcast %cst_58 : f32 to vector<8x128xf32>
    %220 = arith.addf %218, %219 : vector<8x128xf32>
    %221 = arith.mulf %220, %207 : vector<8x128xf32>
    %cst_59 = arith.constant 0.000000e+00 : f32
    %222 = vector.broadcast %cst_59 : f32 to vector<8x128xf32>
    %223 = arith.subf %222, %202 : vector<8x128xf32>
    %224 = arith.mulf %223, %202 : vector<8x128xf32>
    %225 = math.exp %224 : vector<8x128xf32>
    %226 = arith.mulf %221, %225 : vector<8x128xf32>
    %cst_60 = arith.constant 1.000000e+00 : f32
    %227 = vector.broadcast %cst_60 : f32 to vector<8x128xf32>
    %228 = arith.subf %227, %226 : vector<8x128xf32>
    %229 = arith.mulf %201, %228 : vector<8x128xf32>
    %cst_61 = arith.constant 1.000000e+00 : f32
    %230 = vector.broadcast %cst_61 : f32 to vector<8x128xf32>
    %231 = arith.addf %230, %229 : vector<8x128xf32>
    %232 = arith.mulf %194, %231 : vector<8x128xf32>
    %c0_62 = arith.constant 0 : index
    %c0_63 = arith.constant 0 : index
    %233 = vector.load %arg7[%c0_62, %c0_63] : memref<8x128xf32, #tpu.memory_space<vmem>>, vector<8x128xf32>
    tpu.vector_store %arg7[%c0_62, %c0_63], %232 {strides = array<i32>} : memref<8x128xf32, #tpu.memory_space<vmem>>, vector<8x128xf32>,
    return
  }
  func.func @transform_0(%arg0: i32) -> (i32, i32) {
    %c0_i32 = arith.constant 0 : i32
    %c0_i32_0 = arith.constant 0 : i32
    return %arg0, %c0_i32 : i32, i32
  }
  func.func @transform_1(%arg0: i32) -> (i32, i32) {
    %c0_i32 = arith.constant 0 : i32
    %c0_i32_0 = arith.constant 0 : i32
    return %arg0, %c0_i32 : i32, i32
  }
  func.func @transform_2(%arg0: i32) -> (i32, i32) {
    %c0_i32 = arith.constant 0 : i32
    %c0_i32_0 = arith.constant 0 : i32
    %c0_i32_1 = arith.constant 0 : i32
    return %c0_i32, %c0_i32_0 : i32, i32
  }
  func.func @transform_3(%arg0: i32) -> (i32, i32) {
    %c0_i32 = arith.constant 0 : i32
    %c0_i32_0 = arith.constant 0 : i32
    %c0_i32_1 = arith.constant 0 : i32
    return %c0_i32, %c0_i32_0 : i32, i32
  }
  func.func @transform_4(%arg0: i32) -> (i32, i32) {
    %c0_i32 = arith.constant 0 : i32
    %c0_i32_0 = arith.constant 0 : i32
    %c0_i32_1 = arith.constant 0 : i32
    return %c0_i32, %c0_i32_0 : i32, i32
  }
  func.func @transform_5(%arg0: i32) -> (i32, i32) {
    %c0_i32 = arith.constant 0 : i32
    %c0_i32_0 = arith.constant 0 : i32
    %c0_i32_1 = arith.constant 0 : i32
    return %c0_i32, %c0_i32_0 : i32, i32
  }
  func.func @transform_6(%arg0: i32) -> (i32, i32) {
    %c0_i32 = arith.constant 0 : i32
    %c0_i32_0 = arith.constant 0 : i32
    return %arg0, %c0_i32 : i32, i32
  }
}

</mosaic_0001>

<llo_original>
// kernel: tpu_custom_call.1
$region0: #{tpu_custom_call.1}
  #allocation0 [shape = 'u32[]', space=smem, size = 0x4, offset = 0x4, fixed_abs, tag = 'smem constant byte address 0x4 - core index']
  #allocation1 [shape = 'u32[144,128]{1,0:T(1,128)}', space=vmem, size = 0x12000, scoped, tag = 'internal scratch']
  %s0 = inlined_call_operand.hbm [shape: f32[8,32], index: 0, kind: input, shape index: {}]
  %s1 = inlined_call_operand.hbm [shape: f32[8,32], index: 1, kind: input, shape index: {}]
  %s2 = inlined_call_operand.hbm [shape: f32[128,128], index: 2, kind: input, shape index: {}]
  %s3 = inlined_call_operand.vmem [shape: f32[8,128], index: 3, kind: input, shape index: {}]
  %s4 = inlined_call_operand.vmem [shape: f32[1,128], index: 4, kind: input, shape index: {}]
  %s5 = inlined_call_operand.vmem [shape: f32[1,128], index: 5, kind: input, shape index: {}]
  %s6 = inlined_call_operand.hbm [shape: f32[8,128], index: 6, kind: output, shape index: {}]
  %s7 = sld [smem:[#allocation0]]
  $region46: #{tpu_custom_call.1} parent=0
    _
  %s9 = ssub.s32 1, %s7
  %s10 = scalar_select 0, %s9, %s7
  $region1: #{tpu_custom_call.1} parent=0
    #allocation2 [shape = 'u8[4096]{0}', space=vmem, size = 0x1000, scoped, tag = 'input window, operand 0, single buffered']
    #allocation3 [shape = 's32[1]{0}', space=sflag, size = 0x4, scoped, tag = 'scoped memory for tpu_custom_call.1']
    #allocation4 [shape = 's32[1]{0}', space=sflag, size = 0x4, scoped, tag = 'scoped memory for tpu_custom_call.1']
    #allocation5 [shape = 'u8[4096]{0}', space=vmem, size = 0x1000, scoped, tag = 'input window, operand 1, single buffered']
    #allocation6 [shape = 's32[1]{0}', space=sflag, size = 0x4, scoped, tag = 'scoped memory for tpu_custom_call.1']
    #allocation7 [shape = 'u8[65536]{0}', space=vmem, size = 0x10000, scoped, tag = 'input window, operand 2, single buffered']
    #allocation8 [shape = 'u8[4096]{0}', space=vmem, size = 0x1000, scoped, tag = 'output window, operand 0, single buffered']
    %11 = vsyncpa [#allocation3], 0
    %12 = vsyncpa [#allocation6], 0
    %13 = vsyncpa [#allocation4], 0
    // Predicated region
    $region2: #{tpu_custom_call.1} parent=1 // pred_check
      _
    $region3: #{tpu_custom_call.1} parent=1 // pred_check_branch
      %15 = sbr.rel (0) target = $region5
    $region4: #{tpu_custom_call.1} parent=1 // pred_region
      %s17 = ssub.s32 128, 128
      %18 = vsyncadd [#allocation3], %s17
      %s20 = sshll.u32 [#allocation2], 4
      %s21 = int_to_ptr.vmem [resolvable:$true] %s20
      %23 = dma.hbm_to_vmem [thread:$0]  %s0, 128, %s21, [#allocation3]
    $region5: #{tpu_custom_call.1} parent=1 // pred_fallthru
      _
    // Predicated region
    $region6: #{tpu_custom_call.1} parent=1 // pred_check
      _
    $region7: #{tpu_custom_call.1} parent=1 // pred_check_branch
      %25 = sbr.rel (0) target = $region9
    $region8: #{tpu_custom_call.1} parent=1 // pred_region
      %s27 = ssub.s32 128, 128
      %28 = vsyncadd [#allocation6], %s27
      %s30 = sshll.u32 [#allocation5], 4
      %s31 = int_to_ptr.vmem [resolvable:$true] %s30
      %33 = dma.hbm_to_vmem [thread:$0]  %s1, 128, %s31, [#allocation6]
    $region9: #{tpu_custom_call.1} parent=1 // pred_fallthru
      _
    // Predicated region
    $region10: #{tpu_custom_call.1} parent=1 // pred_check
      _
    $region11: #{tpu_custom_call.1} parent=1 // pred_check_branch
      %35 = sbr.rel (0) target = $region13
    $region12: #{tpu_custom_call.1} parent=1 // pred_region
      %s37 = ssub.s32 2048, 2048
      %38 = vsyncadd [#allocation6], %s37
      %s39 = sshll.u32 [#allocation7], 4
      %s40 = int_to_ptr.vmem [resolvable:$true] %s39
      %45 = dma.hbm_to_vmem [thread:$0]  %s2, 2048, %s40, [#allocation6], 128, 128, 8
    $region13: #{tpu_custom_call.1} parent=1 // pred_fallthru
      _
    // Predicated region
    $region14: #{tpu_custom_call.1} parent=1 // pred_check
      _
    $region15: #{tpu_custom_call.1} parent=1 // pred_check_branch
      %47 = sbr.rel (0) target = $region17
    $region16: #{tpu_custom_call.1} parent=1 // pred_region
      _
    $region17: #{tpu_custom_call.1} parent=1 // pred_fallthru
      _
    // Predicated region
    $region18: #{tpu_custom_call.1} parent=1 // pred_check
      _
    $region19: #{tpu_custom_call.1} parent=1 // pred_check_branch
      %49 = sbr.rel (0) target = $region21
    $region20: #{tpu_custom_call.1} parent=1 // pred_region
      _
    $region21: #{tpu_custom_call.1} parent=1 // pred_fallthru
      _
    // Predicated region
    $region22: #{tpu_custom_call.1} parent=1 // pred_check
      _
    $region23: #{tpu_custom_call.1} parent=1 // pred_check_branch
      %51 = sbr.rel (0) target = $region25
    $region24: #{tpu_custom_call.1} parent=1 // pred_region
      _
    $region25: #{tpu_custom_call.1} parent=1 // pred_fallthru
      _
    // Predicated region
    $region26: #{tpu_custom_call.1} parent=1 // pred_check
      _
    $region27: #{tpu_custom_call.1} parent=1 // pred_check_branch
      %53 = sbr.rel (0) target = $region29
    $region28: #{tpu_custom_call.1} parent=1 // pred_region
      %54 = dma.done [#allocation3], 128
    $region29: #{tpu_custom_call.1} parent=1 // pred_fallthru
      _
    // Predicated region
    $region30: #{tpu_custom_call.1} parent=1 // pred_check
      _
    $region31: #{tpu_custom_call.1} parent=1 // pred_check_branch
      %56 = sbr.rel (0) target = $region33
    $region32: #{tpu_custom_call.1} parent=1 // pred_region
      %57 = dma.done [#allocation6], 128
    $region33: #{tpu_custom_call.1} parent=1 // pred_fallthru
      _
    // Predicated region
    $region34: #{tpu_custom_call.1} parent=1 // pred_check
      _
    $region35: #{tpu_custom_call.1} parent=1 // pred_check_branch
      %59 = sbr.rel (0) target = $region37
    $region36: #{tpu_custom_call.1} parent=1 // pred_region
      %60 = dma.done [#allocation6], 2048
    $region37: #{tpu_custom_call.1} parent=1 // pred_fallthru
      _
    %v61 = vld [vmem:[#allocation2] sm:$0xff]
    %v62 = vld [vmem:[#allocation5] sm:$0xff]
    %v63 = vsub.f32 %v61, %v62
    %v64 = vand.u32 2147483647, %v63
    %v65 = vmul.f32 %v61, %v62
    %v66 = vmul.f32 %v64, %v64
    %vm67 = vcmask 261120
    %v68 = vsel %vm67, %v66, 0.0
    %69 = vadd.xlane.f32.xlu0 %v68
    %v70 = vpop.xlane.xlu0 %69
    %v71 = vmul.f32 %v65, %v65
    %v72 = vsel %vm67, %v71, 0.0
    %73 = vadd.xlane.f32.xlu0 %v72
    %v74 = vpop.xlane.xlu0 %73
    %v75 = vmul.f32 %v61, %v61
    %v76 = vsel %vm67, %v75, 0.0
    %77 = vadd.xlane.f32.xlu0 %v76
    %v78 = vpop.xlane.xlu0 %77
    %v79 = vmul.f32 %v62, %v62
    %v80 = vsel %vm67, %v79, 0.0
    %81 = vadd.xlane.f32.xlu0 %v80
    %v82 = vpop.xlane.xlu0 %81
    %v83 = vmul.f32 %v65, %v64
    %v84 = vsel %vm67, %v83, 0.0
    %85 = vadd.xlane.f32.xlu0 %v84
    %v86 = vpop.xlane.xlu0 %85
    %v87 = vmul.f32 %v74, %v70
    %v88 = vmax.f32 %v87, 1e-16
    %v89 = vrsqrt.pop %v88
    %v90 = vmul.f32 %v86, %v89
    %v91 = vmul.f32 %v61, %v64
    %v92 = vsel %vm67, %v91, 0.0
    %93 = vadd.xlane.f32.xlu0 %v92
    %v94 = vpop.xlane.xlu0 %93
    %v95 = vmul.f32 %v78, %v70
    %v96 = vmax.f32 %v95, 1e-16
    %v97 = vrsqrt.pop %v96
    %v98 = vmul.f32 %v94, %v97
    %v99 = vmul.f32 %v61, %v65
    %v100 = vsel %vm67, %v99, 0.0
    %101 = vadd.xlane.f32.xlu0 %v100
    %v102 = vpop.xlane.xlu0 %101
    %v103 = vmul.f32 %v78, %v74
    %v104 = vmax.f32 %v103, 1e-16
    %v105 = vrsqrt.pop %v104
    %v106 = vmul.f32 %v102, %v105
    %v107 = vmul.f32 %v62, %v64
    %v108 = vsel %vm67, %v107, 0.0
    %109 = vadd.xlane.f32.xlu0 %v108
    %v110 = vpop.xlane.xlu0 %109
    %v111 = vmul.f32 %v82, %v70
    %v112 = vmax.f32 %v111, 1e-16
    %v113 = vrsqrt.pop %v112
    %v114 = vmul.f32 %v110, %v113
    %v115 = vmul.f32 %v62, %v65
    %v116 = vsel %vm67, %v115, 0.0
    %117 = vadd.xlane.f32.xlu0 %v116
    %v118 = vpop.xlane.xlu0 %117
    %v119 = vmul.f32 %v82, %v74
    %v120 = vmax.f32 %v119, 1e-16
    %v121 = vrsqrt.pop %v120
    %v122 = vmul.f32 %v118, %v121
    %v123 = vsel %vm67, %v65, 0.0
    %124 = vadd.xlane.f32.xlu0 %v123
    %v125 = vpop.xlane.xlu0 %124
    %v126 = vmul.f32 %v82, %v78
    %v127 = vmax.f32 %v126, 1e-16
    %v128 = vrsqrt.pop %v127
    %v129 = vmul.f32 %v125, %v128
    %v130 = vsel %vm67, %v64, 0.0
    %131 = vadd.xlane.f32.xlu0 %v130
    %v132 = vpop.xlane.xlu0 %131
    %v133 = vadd.f32 %v132, %v125
    %v134 = vsel %vm67, %v61, 0.0
    %135 = vadd.xlane.f32.xlu0 %v134
    %v136 = vpop.xlane.xlu0 %135
    %v137 = vadd.f32 %v133, %v136
    %v138 = vsel %vm67, %v62, 0.0
    %139 = vadd.xlane.f32.xlu0 %v138
    %v140 = vpop.xlane.xlu0 %139
    %v141 = vadd.f32 %v137, %v140
    %v142 = vadd.f32 %v90, 0.0
    %v143 = vadd.f32 %v142, %v98
    %v144 = vadd.f32 %v143, %v106
    %v145 = vadd.f32 %v144, %v114
    %v146 = vadd.f32 %v145, %v122
    %v147 = vadd.f32 %v146, %v129
    %v148 = vadd.f32 %v141, %v147
    %v149 = vmul.f32 %v148, 0.0074626864
    %v150 = vsub.f32 %v64, %v149
    %v151 = vmul.f32 %v150, %v150
    %v152 = vsel %vm67, %v151, 0.0
    %153 = vadd.xlane.f32.xlu0 %v152
    %v154 = vpop.xlane.xlu0 %153
    %v155 = vsub.f32 %v65, %v149
    %v156 = vmul.f32 %v155, %v155
    %v157 = vsel %vm67, %v156, 0.0
    %158 = vadd.xlane.f32.xlu0 %v157
    %v159 = vpop.xlane.xlu0 %158
    %v160 = vadd.f32 %v154, %v159
    %v161 = vsub.f32 %v61, %v149
    %v162 = vmul.f32 %v161, %v161
    %v163 = vsel %vm67, %v162, 0.0
    %164 = vadd.xlane.f32.xlu0 %v163
    %v165 = vpop.xlane.xlu0 %164
    %v166 = vadd.f32 %v160, %v165
    %v167 = vsub.f32 %v62, %v149
    %v168 = vmul.f32 %v167, %v167
    %v169 = vsel %vm67, %v168, 0.0
    %170 = vadd.xlane.f32.xlu0 %v169
    %v171 = vpop.xlane.xlu0 %170
    %v172 = vadd.f32 %v166, %v171
    %v173 = vsub.f32 %v90, %v149
    %v174 = vmul.f32 %v173, %v173
    %v175 = vadd.f32 %v172, %v174
    %v176 = vsub.f32 %v98, %v149
    %v177 = vmul.f32 %v176, %v176
    %v178 = vadd.f32 %v175, %v177
    %v179 = vsub.f32 %v106, %v149
    %v180 = vmul.f32 %v179, %v179
    %v181 = vadd.f32 %v178, %v180
    %v182 = vsub.f32 %v114, %v149
    %v183 = vmul.f32 %v182, %v182
    %v184 = vadd.f32 %v181, %v183
    %v185 = vsub.f32 %v122, %v149
    %v186 = vmul.f32 %v185, %v185
    %v187 = vadd.f32 %v184, %v186
    %v188 = vsub.f32 %v129, %v149
    %v189 = vmul.f32 %v188, %v188
    %v190 = vadd.f32 %v187, %v189
    %v191 = vmul.f32 %v190, 0.0074626864
    %v192 = vadd.f32 %v191, 1e-05
    %v193 = vrsqrt.pop %v192
    %195 = vrot.lane.b32.xlu0 %v65, 32
    %v196 = vpop.permute.xlu0 %195
    %199 = vrot.lane.b32.xlu0 %v61, 64
    %v200 = vpop.permute.xlu0 %199
    %203 = vrot.lane.b32.xlu0 %v62, 96
    %v204 = vpop.permute.xlu0 %203
    %v206 = vsel %vm67, %v64, %v196
    %vm207 = vcmask 523264
    %v208 = vsel %vm207, %v206, %v200
    %vm209 = vcmask 785408
    %v210 = vsel %vm209, %v208, %v204
    %v211 = vld [vmem:[#allocation7] sm:$0xff]
    %v212 = vld [vmem:[#allocation7 + $0x8] sm:$0xff]
    %v213 = vld [vmem:[#allocation7 + $0x10] sm:$0xff]
    %v214 = vld [vmem:[#allocation7 + $0x18] sm:$0xff]
    %v215 = vld [vmem:[#allocation7 + $0x20] sm:$0xff]
    %v216 = vld [vmem:[#allocation7 + $0x28] sm:$0xff]
    %v217 = vld [vmem:[#allocation7 + $0x30] sm:$0xff]
    %v218 = vld [vmem:[#allocation7 + $0x38] sm:$0xff]
    %v219 = vld [vmem:[#allocation7 + $0x40] sm:$0xff]
    %v220 = vld [vmem:[#allocation7 + $0x48] sm:$0xff]
    %v221 = vld [vmem:[#allocation7 + $0x50] sm:$0xff]
    %v222 = vld [vmem:[#allocation7 + $0x58] sm:$0xff]
    %v223 = vld [vmem:[#allocation7 + $0x60] sm:$0xff]
    %v224 = vld [vmem:[#allocation7 + $0x68] sm:$0xff]
    %v225 = vld [vmem:[#allocation7 + $0x70] sm:$0xff]
    %v226 = vld [vmem:[#allocation7 + $0x78] sm:$0xff]
    %v227 = vlaneseq
    %v228 = vand.u32 %v227, 127
    %vm229 = vcmp.eq.s32.totalorder %v228, 0
    %v230 = vsel %vm229, %v90, 0.0
    %v231 = vadd.f32 %v230, 0.0
    %vm232 = vcmp.eq.s32.totalorder %v228, 1
    %v233 = vsel %vm232, %v98, 0.0
    %v234 = vadd.f32 %v231, %v233
    %vm235 = vcmp.eq.s32.totalorder %v228, 2
    %v236 = vsel %vm235, %v106, 0.0
    %v237 = vadd.f32 %v234, %v236
    %vm238 = vcmp.eq.s32.totalorder %v228, 3
    %v239 = vsel %vm238, %v114, 0.0
    %v240 = vadd.f32 %v237, %v239
    %vm241 = vcmp.eq.s32.totalorder %v228, 4
    %v242 = vsel %vm241, %v122, 0.0
    %v243 = vadd.f32 %v240, %v242
    %vm244 = vcmp.eq.s32.totalorder %v228, 5
    %v245 = vsel %vm244, %v129, 0.0
    %v246 = vadd.f32 %v243, %v245
    %v247 = vld [vmem:[%s3] sm:$0xff]
    %vm248 = vcmask 64512
    %v250 = vsel %vm248, %v246, 0
    %252 = vmatprep.subr.mxu0 0.0
    %253 = vmatpush1.msra.mxu0 %v247
    %254 = vmatprep.subr.mxu0 0.0
    %255 = vmatpush1.msra.mxu0 0.0
    %256 = vmatprep.subr.mxu0 0.0
    %257 = vmatpush1.msra.mxu0 0.0
    %258 = vmatprep.subr.mxu0 0.0
    %259 = vmatpush1.msra.mxu0 0.0
    %260 = vmatprep.subr.mxu0 0.0
    %261 = vmatpush1.msra.mxu0 0.0
    %262 = vmatprep.subr.mxu0 0.0
    %263 = vmatpush1.msra.mxu0 0.0
    %264 = vmatprep.subr.mxu0 0.0
    %265 = vmatpush1.msra.mxu0 0.0
    %266 = vmatprep.subr.mxu0 0.0
    %267 = vmatpush1.msra.mxu0 0.0
    %268 = vmatprep.subr.mxu0 0.0
    %269 = vmatpush1.msra.mxu0 0.0
    %270 = vmatprep.subr.mxu0 0.0
    %271 = vmatpush1.msra.mxu0 0.0
    %272 = vmatprep.subr.mxu0 0.0
    %273 = vmatpush1.msra.mxu0 0.0
    %274 = vmatprep.subr.mxu0 0.0
    %275 = vmatpush1.msra.mxu0 0.0
    %276 = vmatprep.subr.mxu0 0.0
    %277 = vmatpush1.msra.mxu0 0.0
    %278 = vmatprep.subr.mxu0 0.0
    %279 = vmatpush1.msra.mxu0 0.0
    %280 = vmatprep.subr.mxu0 0.0
    %281 = vmatpush1.msra.mxu0 0.0
    %282 = vmatprep.subr.mxu0 0.0
    %283 = vmatpush1.msra.mxu0 0.0
    %284 = vmatprep.subr.mxu0 0.0
    %285 = vmatpush1.msra.mxu0 0.0
    %286 = vmatprep.subr.mxu0 0.0
    %287 = vmatpush1.msra.mxu0 0.0
    %288 = vmatprep.subr.mxu0 0.0
    %289 = vmatpush1.msra.mxu0 0.0
    %290 = vmatprep.subr.mxu0 0.0
    %291 = vmatpush1.msra.mxu0 0.0
    %292 = vmatprep.subr.mxu0 0.0
    %293 = vmatpush1.msra.mxu0 0.0
    %294 = vmatprep.subr.mxu0 0.0
    %295 = vmatpush1.msra.mxu0 0.0
    %296 = vmatprep.subr.mxu0 0.0
    %297 = vmatpush1.msra.mxu0 0.0
    %298 = vmatprep.subr.mxu0 0.0
    %299 = vmatpush1.msra.mxu0 0.0
    %300 = vmatprep.subr.mxu0 0.0
    %301 = vmatpush1.msra.mxu0 0.0
    %302 = vmatprep.subr.mxu0 0.0
    %303 = vmatpush1.msra.mxu0 0.0
    %304 = vmatprep.subr.mxu0 0.0
    %305 = vmatpush1.msra.mxu0 0.0
    %306 = vmatprep.subr.mxu0 0.0
    %307 = vmatpush1.msra.mxu0 0.0
    %308 = vmatprep.subr.mxu0 0.0
    %309 = vmatpush1.msra.mxu0 0.0
    %310 = vmatprep.subr.mxu0 0.0
    %311 = vmatpush1.msra.mxu0 0.0
    %312 = vmatprep.subr.mxu0 0.0
    %313 = vmatpush1.msra.mxu0 0.0
    %314 = vmatprep.subr.mxu0 0.0
    %315 = vmatpush1.msra.mxu0 0.0
    %316 = vmatprep.mubr.f32.mxu0 0.0
    %317 = vmatmul.mubr.f32.gmra.mrb[0].mxu0 %v250
    %v318 = vpop.f32.mrb[0].mxu0
    %v319 = vadd.f32 0.0, %v318
    %v320 = vpop.f32.mrb[0].mxu0
    %321 = vdwg.mxu0
    %322 = vmatprep.subr.mxu0 0.0
    %323 = vmatpush1.msra.mxu0 %v211
    %324 = vmatprep.subr.mxu0 0.0
    %325 = vmatpush1.msra.mxu0 %v212
    %326 = vmatprep.subr.mxu0 0.0
    %327 = vmatpush1.msra.mxu0 %v213
    %328 = vmatprep.subr.mxu0 0.0
    %329 = vmatpush1.msra.mxu0 %v214
    %330 = vmatprep.subr.mxu0 0.0
    %331 = vmatpush1.msra.mxu0 %v215
    %332 = vmatprep.subr.mxu0 0.0
    %333 = vmatpush1.msra.mxu0 %v216
    %334 = vmatprep.subr.mxu0 0.0
    %335 = vmatpush1.msra.mxu0 %v217
    %336 = vmatprep.subr.mxu0 0.0
    %337 = vmatpush1.msra.mxu0 %v218
    %338 = vmatprep.subr.mxu0 0.0
    %339 = vmatpush1.msra.mxu0 %v219
    %340 = vmatprep.subr.mxu0 0.0
    %341 = vmatpush1.msra.mxu0 %v220
    %342 = vmatprep.subr.mxu0 0.0
    %343 = vmatpush1.msra.mxu0 %v221
    %344 = vmatprep.subr.mxu0 0.0
    %345 = vmatpush1.msra.mxu0 %v222
    %346 = vmatprep.subr.mxu0 0.0
    %347 = vmatpush1.msra.mxu0 %v223
    %348 = vmatprep.subr.mxu0 0.0
    %349 = vmatpush1.msra.mxu0 %v224
    %350 = vmatprep.subr.mxu0 0.0
    %351 = vmatpush1.msra.mxu0 %v225
    %352 = vmatprep.subr.mxu0 0.0
    %353 = vmatpush1.msra.mxu0 %v226
    %354 = vmatprep.subr.mxu0 0.0
    %355 = vmatpush1.msra.mxu0 0.0
    %356 = vmatprep.subr.mxu0 0.0
    %357 = vmatpush1.msra.mxu0 0.0
    %358 = vmatprep.subr.mxu0 0.0
    %359 = vmatpush1.msra.mxu0 0.0
    %360 = vmatprep.subr.mxu0 0.0
    %361 = vmatpush1.msra.mxu0 0.0
    %362 = vmatprep.subr.mxu0 0.0
    %363 = vmatpush1.msra.mxu0 0.0
    %364 = vmatprep.subr.mxu0 0.0
    %365 = vmatpush1.msra.mxu0 0.0
    %366 = vmatprep.subr.mxu0 0.0
    %367 = vmatpush1.msra.mxu0 0.0
    %368 = vmatprep.subr.mxu0 0.0
    %369 = vmatpush1.msra.mxu0 0.0
    %370 = vmatprep.subr.mxu0 0.0
    %371 = vmatpush1.msra.mxu0 0.0
    %372 = vmatprep.subr.mxu0 0.0
    %373 = vmatpush1.msra.mxu0 0.0
    %374 = vmatprep.subr.mxu0 0.0
    %375 = vmatpush1.msra.mxu0 0.0
    %376 = vmatprep.subr.mxu0 0.0
    %377 = vmatpush1.msra.mxu0 0.0
    %378 = vmatprep.subr.mxu0 0.0
    %379 = vmatpush1.msra.mxu0 0.0
    %380 = vmatprep.subr.mxu0 0.0
    %381 = vmatpush1.msra.mxu0 0.0
    %382 = vmatprep.subr.mxu0 0.0
    %383 = vmatpush1.msra.mxu0 0.0
    %384 = vmatprep.subr.mxu0 0.0
    %385 = vmatpush1.msra.mxu0 0.0
    %386 = vmatprep.mubr.f32.mxu0 0.0
    %387 = vmatmul.mubr.f32.gmra.mrb[0].mxu0 %v210
    %v388 = vpop.f32.mrb[0].mxu0
    %v389 = vadd.f32 %v319, %v388
    %v390 = vpop.f32.mrb[0].mxu0
    %391 = vdwg.mxu0
    %v392 = vmul.f32 %v193, %v389
    %v393 = vmul.f32 %v193, %v149
    %v394 = vld [vmem:[%s4] sm:$0x1]
    %v396 = vlaneseq
    %v397 = vshrl.u32 %v396, 7
    %v398 = vsub.s32 0, %v397
    %v399 = vrot.slane %v394, %v398
    %v401 = vmul.f32 %v393, %v399
    %v402 = vsub.f32 %v392, %v401
    %v403 = vld [vmem:[%s5] sm:$0x1]
    %v405 = vlaneseq
    %v406 = vshrl.u32 %v405, 7
    %v407 = vsub.s32 0, %v406
    %v408 = vrot.slane %v403, %v407
    %v410 = vadd.f32 %v402, %v408
    %v411 = vmul.f32 %v410, 0.5
    %v412 = vmul.f32 %v410, 0.70710677
    %vm413 = vcmp.ge.f32.partialorder %v412, 0.0
    %v414 = vsel %vm413, 1.0, -1.0
    %v415 = vand.u32 2147483647, %v412
    %v416 = vmul.f32 %v415, 0.3275911
    %v417 = vadd.f32 %v416, 1.0
    %v418 = vrcp.pop %v417
    %v419 = vmul.f32 %v418, 1.0614054
    %v420 = vadd.f32 %v419, -1.4531521
    %v421 = vmul.f32 %v420, %v418
    %v422 = vadd.f32 %v421, 1.4214138
    %v423 = vmul.f32 %v422, %v418
    %v424 = vadd.f32 %v423, -0.28449672
    %v425 = vmul.f32 %v424, %v418
    %v426 = vadd.f32 %v425, 0.2548296
    %v427 = vmul.f32 %v426, %v418
    %v428 = vsub.f32 0.0, %v415
    %v429 = vmul.f32 %v428, %v415
    %v430 = vmul.f32 %v429, 1.442695
    %v431 = vpow.pop %v430
    %v432 = vmul.f32 %v427, %v431
    %v433 = vsub.f32 1.0, %v432
    %v434 = vmul.f32 %v414, %v433
    %v435 = vadd.f32 %v434, 1.0
    %v436 = vmul.f32 %v411, %v435
    %437 = vst [vmem:[#allocation8] sm:$0xff] %v436
    // Predicated region
    $region38: #{tpu_custom_call.1} parent=1 // pred_check
      _
    $region39: #{tpu_custom_call.1} parent=1 // pred_check_branch
      %439 = sbr.rel (0) target = $region41
    $region40: #{tpu_custom_call.1} parent=1 // pred_region
      %s441 = ssub.s32 128, 128
      %442 = vsyncadd [#allocation4], %s441
      %s444 = sshll.u32 [#allocation8], 4
      %s445 = int_to_ptr.vmem [resolvable:$true] %s444
      %447 = dma.vmem_to_hbm [thread:$0]  %s445, 128, %s6, [#allocation4]
    $region41: #{tpu_custom_call.1} parent=1 // pred_fallthru
      _
    // Predicated region
    $region42: #{tpu_custom_call.1} parent=1 // pred_check
      _
    $region43: #{tpu_custom_call.1} parent=1 // pred_check_branch
      %449 = sbr.rel (0) target = $region45
    $region44: #{tpu_custom_call.1} parent=1 // pred_region
      %450 = dma.done [#allocation4], 128
    $region45: #{tpu_custom_call.1} parent=1 // pred_fallthru
      _
    %451 = vsyncpa [#allocation3], 1
    %452 = vsyncpa [#allocation6], 1
    %453 = vsyncpa [#allocation4], 1

</llo_original>
